<compile_context>
chip_gen: v6e
topology: v6e:2x2x1
jax: 0.10.0
libtpu: 0.0.40
codegen_flags: <defaults>
</compile_context>

<pallas_src>
import functools

import jax
import jax.numpy as jnp
from jax import lax
from jax.experimental import pallas as pl
from jax.experimental.pallas import tpu as pltpu


def _label_smoothing_kernel(pred_ref, tgt_ref, out_ref, *,
                            n_rows, vocab_size, smoothing, confidence,
                            ignore_index, ignore_col):
    tm = pred_ref.shape[0]
    x = pred_ref[...].astype(jnp.float32)                          # (TM, V) f32

    # ---- pass 1: row max --------------------------------------------------
    m = jnp.max(x, axis=-1, keepdims=True)                         # (TM, 1)
    # ---- pass 2: log-sum-exp ----------------------------------------------
    lse = jnp.log(jnp.sum(jnp.exp(x - m), axis=-1, keepdims=True))  # (TM, 1)

    tgt = tgt_ref[...]                                             # (TM, 1) int32
    col = lax.broadcasted_iota(jnp.int32, (tm, vocab_size), 1)     # (TM, V)

    sv = jnp.float32(smoothing / (vocab_size - 1))
    conf = jnp.float32(confidence)

    # ---- pass 3: fused weighted reduction ----------------------------------
    # sum_j true_dist0[j] * logits[j]  with  true_dist0 = sv everywhere, conf at target.
    w = jnp.where(col == tgt, conf, sv)                            # (TM, V)
    wsum = jnp.sum(w * x, axis=-1, keepdims=True)                  # (TM, 1)

    # sum(true_dist0) == 1, so  sum_j true_dist0[j] * logp[j] = wsum - m - lse.
    acc = wsum - m - lse

    # Zero the ignore column AFTER the scatter (value there is conf if target==ignore_col,
    # else sv).  Static column slice — no V-wide masked reduce.
    if ignore_col is not None:
        x_ig = x[:, ignore_col:ignore_col + 1]                     # (TM, 1)
        c_ig = jnp.where(tgt == jnp.int32(ignore_col), conf, sv)
        acc = acc - c_ig * (x_ig - m - lse)

    row_loss = -acc                                                # (TM, 1)

    # Mask: rows whose target is ignore_index contribute 0; out-of-bounds tail rows
    # (grid = cdiv(N, TM)) also contribute 0.  Applied before the write so garbage /
    # NaN from OOB reads cannot leak into the partial sum.
    row0 = pl.program_id(0) * tm
    rid = row0 + lax.broadcasted_iota(jnp.int32, (tm, 1), 0)       # (TM, 1)
    keep = jnp.logical_and(rid < n_rows, tgt != jnp.int32(ignore_index))
    row_loss = jnp.where(keep, row_loss, jnp.float32(0.0))

    # Per-block partial sum, written lane-dense (all 1024 positions hold the same value;
    # the host reads [:, 0, 0]).
    psum = jnp.sum(row_loss, axis=0, keepdims=True)                # (1, 1)
    out_ref[...] = jnp.broadcast_to(psum[None], (1, 8, 128))


def _per_row_bytes(vocab, itemsize):
    # double-buffered input block + f32 cast slab + i32 iota/weight temps + one
    # ephemeral elementwise slab (exp / select), plus small per-row columns.
    return vocab * (2 * itemsize + 20) + 64


def _default_vmem_limit():
    """Generation-aware scoped-VMEM limit: ~3/4 of physical, capped at 100 MiB."""
    phys = None
    try:
        info = pltpu.get_tpu_info()
        phys = getattr(info, "vmem_capacity_bytes", None)
    except Exception:
        phys = None
    if not phys:
        return 48 << 20          # safe everywhere (v5e/v6e 128 MiB, v7x 64 MiB)
    return int(min(phys * 3 // 4, 100 << 20))


def _pick_block_rows(n_rows, vocab, itemsize, budget_bytes):
    """Largest row tile fitting the VMEM budget, with >=2 grid steps when possible."""
    per_row = _per_row_bytes(vocab, itemsize)
    rows = max(budget_bytes // per_row, 1)
    mult = 16 if itemsize < 4 else 8      # bf16 packs 16 sublanes per vreg
    if n_rows > mult:
        # Keep at least 2 grid steps so ("parallel",) splits across v7x's 2 TensorCores
        # (and the DMA pipeline has something to overlap).
        half = -(-n_rows // 2)
        rows = min(rows, -(-half // mult) * mult)
    rows = int(min(rows, 2048, n_rows))
    rows = max(mult, (rows // mult) * mult)
    return rows


def label_smoothing_loss(pred, target, *, vocab_size, smoothing=0.1,
                         ignore_index=-100, block_rows=None,
                         vmem_limit_bytes=None):
    """pred: [N, V] float32/bfloat16; target: [N] int. Returns scalar mean loss (f32)."""
    n, v = pred.shape
    assert v == vocab_size
    confidence = 1.0 - smoothing

    # PyTorch wraps negative column indices: true_dist[:, -100] -> column V - 100.
    ignore_col = ignore_index if ignore_index >= 0 else vocab_size + ignore_index
    if not (0 <= ignore_col < vocab_size):
        ignore_col = None

    itemsize = jnp.dtype(pred.dtype).itemsize
    if vmem_limit_bytes is None:
        vmem_limit_bytes = _default_vmem_limit()
    if block_rows is None:
        block_rows = _pick_block_rows(n, v, itemsize,
                                      budget_bytes=int(vmem_limit_bytes * 0.85))
    # Make sure the scoped limit covers the chosen tile even at extreme vocab sizes.
    needed = block_rows * _per_row_bytes(v, itemsize) + (2 << 20)
    vmem_limit_bytes = int(max(vmem_limit_bytes, needed))

    num_blocks = pl.cdiv(n, block_rows)
    target2d = target.astype(jnp.int32).reshape(n, 1)   # tiny; no logits pad/copy

    kernel = functools.partial(
        _label_smoothing_kernel,
        n_rows=n,
        vocab_size=vocab_size,
        smoothing=smoothing,
        confidence=confidence,
        ignore_index=ignore_index,
        ignore_col=ignore_col,
    )

    partials = pl.pallas_call(
        kernel,
        out_shape=jax.ShapeDtypeStruct((num_blocks, 8, 128), jnp.float32),
        grid_spec=pltpu.PrefetchScalarGridSpec(
            num_scalar_prefetch=0,
            grid=(num_blocks,),
            in_specs=[
                pl.BlockSpec((block_rows, v), lambda i: (i, 0)),
                pl.BlockSpec((block_rows, 1), lambda i: (i, 0)),
            ],
            out_specs=pl.BlockSpec((1, 8, 128), lambda i: (i, 0, 0)),
        ),
        compiler_params=pltpu.CompilerParams(
            dimension_semantics=("parallel",),
            vmem_limit_bytes=vmem_limit_bytes),
    )(pred, target2d)

    # Mean over ALL original rows (including ignored ones) — matches the PyTorch module.
    return jnp.sum(partials[:, 0, 0]) / jnp.float32(n)


def _reference(pred, target, *, vocab_size, smoothing=0.1, ignore_index=-100):
    """Pure-JAX reference mirroring the PyTorch forward."""
    logp = jax.nn.log_softmax(pred.astype(jnp.float32), axis=-1)
    n, v = pred.shape
    col = jnp.arange(v)[None, :]
    tgt = target[:, None]
    true_dist = jnp.where(col == tgt, 1.0 - smoothing, smoothing / (v - 1))
    ignore_col = ignore_index if ignore_index >= 0 else v + ignore_index
    if 0 <= ignore_col < v:
        true_dist = true_dist.at[:, ignore_col].set(0.0)
    true_dist = jnp.where(tgt == ignore_index, 0.0, true_dist)
    return jnp.mean(jnp.sum(-true_dist * logp, axis=-1))


if __name__ == "__main__":
    # batch=2, seq=8 -> N=16 rows; vocab=128 (>=100 so the -100 column wrap is defined).
    batch, seq, vocab = 2, 8, 128
    n = batch * seq
    key = jax.random.PRNGKey(0)
    k_pred, k_tgt = jax.random.split(key)

    pred = jax.random.normal(k_pred, (n, vocab), dtype=jnp.float32)
    target = jax.random.randint(k_tgt, (n,), 0, vocab, dtype=jnp.int32)
    # Exercise the ignore-row path.
    target = target.at[3].set(-100).at[11].set(-100)

    # f32 path
    loss = label_smoothing_loss(pred, target, vocab_size=vocab,
                                smoothing=0.1, ignore_index=-100)
    loss = jax.block_until_ready(loss)
    ref = _reference(pred, target, vocab_size=vocab, smoothing=0.1, ignore_index=-100)
    assert jnp.allclose(loss, ref, atol=1e-4, rtol=1e-5), (loss, ref)

    # bf16 input path (halved HBM traffic); in-kernel math remains f32.
    pred_bf16 = pred.astype(jnp.bfloat16)
    loss_bf16 = jax.block_until_ready(
        label_smoothing_loss(pred_bf16, target, vocab_size=vocab,
                             smoothing=0.1, ignore_index=-100))
    ref_bf16 = _reference(pred_bf16.astype(jnp.float32), target, vocab_size=vocab,
                          smoothing=0.1, ignore_index=-100)
    assert jnp.allclose(loss_bf16, ref_bf16, atol=1e-4, rtol=1e-4), (loss_bf16, ref_bf16)

    # Non-multiple-of-block row count (exercises the in-kernel tail-row masking — no pad).
    n2 = 13
    pred2 = pred[:n2]
    target2 = target[:n2]
    loss2 = jax.block_until_ready(
        label_smoothing_loss(pred2, target2, vocab_size=vocab,
                             smoothing=0.1, ignore_index=-100))
    ref2 = _reference(pred2, target2, vocab_size=vocab, smoothing=0.1, ignore_index=-100)
    assert jnp.allclose(loss2, ref2, atol=1e-4, rtol=1e-5), (loss2, ref2)

    print("KERNEL_OK")
</pallas_src>

<mosaic_0001>
module attributes {stable_mosaic.version = 11 : i64} {
  func.func @_label_smoothing_kernel(%arg0: i32, %arg1: memref<8x128xf32, #tpu.memory_space<vmem>>, %arg2: memref<8x1xi32, #tpu.memory_space<vmem>>, %arg3: memref<1x8x128xf32, #tpu.memory_space<vmem>>) attributes {dimension_semantics = [#tpu.dimension_semantics<parallel>], iteration_bounds = array<i64: 2>, scalar_prefetch = 0 : i64, scratch_operands = 0 : i64, tpu.core_type = #tpu.core_type<tc>, window_params = [{transform_indices = @transform_0, window_bounds = array<i64: 8, 128>}, {transform_indices = @transform_1, window_bounds = array<i64: 8, 1>}, {transform_indices = @transform_2, window_bounds = array<i64: 1, 8, 128>}]} {
    %c0 = arith.constant 0 : index
    %c0_0 = arith.constant 0 : index
    %0 = vector.load %arg1[%c0, %c0_0] : memref<8x128xf32, #tpu.memory_space<vmem>>, vector<8x128xf32>
    %cst = arith.constant dense<0xFF800000> : vector<8xf32>
    %1 = vector.multi_reduction <maximumf>, %0, %cst [1] : vector<8x128xf32> to vector<8xf32>
    %2 = vector.shape_cast %1 : vector<8xf32> to vector<8x1xf32>
    %3 = vector.broadcast %2 : vector<8x1xf32> to vector<8x128xf32>
    %4 = arith.subf %0, %3 : vector<8x128xf32>
    %5 = math.exp %4 : vector<8x128xf32>
    %cst_1 = arith.constant dense<0.000000e+00> : vector<8xf32>
    %6 = vector.multi_reduction <add>, %5, %cst_1 [1] : vector<8x128xf32> to vector<8xf32>
    %7 = vector.shape_cast %6 : vector<8xf32> to vector<8x1xf32>
    %8 = math.log %7 : vector<8x1xf32>
    %c0_2 = arith.constant 0 : index
    %c0_3 = arith.constant 0 : index
    %9 = vector.load %arg2[%c0_2, %c0_3] : memref<8x1xi32, #tpu.memory_space<vmem>>, vector<8x1xi32>
    %10 = tpu.iota {dimensions = array<i32: 1>} : vector<8x128xi32>
    %11 = vector.broadcast %9 : vector<8x1xi32> to vector<8x128xi32>
    %12 = arith.cmpi eq, %10, %11 : vector<8x128xi32>
    %cst_4 = arith.constant 0.899999976 : f32
    %cst_5 = arith.constant 7.87401571E-4 : f32
    %13 = vector.broadcast %cst_4 : f32 to vector<8x128xf32>
    %14 = vector.broadcast %cst_5 : f32 to vector<8x128xf32>
    %15 = arith.select %12, %13, %14 : vector<8x128xi1>, vector<8x128xf32>
    %16 = arith.mulf %15, %0 : vector<8x128xf32>
    %cst_6 = arith.constant dense<0.000000e+00> : vector<8xf32>
    %17 = vector.multi_reduction <add>, %16, %cst_6 [1] : vector<8x128xf32> to vector<8xf32>
    %18 = vector.shape_cast %17 : vector<8xf32> to vector<8x1xf32>
    %19 = arith.subf %18, %2 : vector<8x1xf32>
    %20 = arith.subf %19, %8 : vector<8x1xf32>
    %21 = vector.extract_strided_slice %0 {offsets = [0, 28], sizes = [8, 1], strides = [1, 1]} : vector<8x128xf32> to vector<8x1xf32>
    %c28_i32 = arith.constant 28 : i32
    %22 = vector.broadcast %c28_i32 : i32 to vector<8x1xi32>
    %23 = arith.cmpi eq, %9, %22 : vector<8x1xi32>
    %cst_7 = arith.constant 0.899999976 : f32
    %cst_8 = arith.constant 7.87401571E-4 : f32
    %24 = vector.broadcast %cst_7 : f32 to vector<8x1xf32>
    %25 = vector.broadcast %cst_8 : f32 to vector<8x1xf32>
    %26 = arith.select %23, %24, %25 : vector<8x1xi1>, vector<8x1xf32>
    %27 = arith.subf %21, %2 : vector<8x1xf32>
    %28 = arith.subf %27, %8 : vector<8x1xf32>
    %29 = arith.mulf %26, %28 : vector<8x1xf32>
    %30 = arith.subf %20, %29 : vector<8x1xf32>
    %cst_9 = arith.constant 0.000000e+00 : f32
    %31 = vector.broadcast %cst_9 : f32 to vector<8x1xf32>
    %32 = arith.subf %31, %30 : vector<8x1xf32>
    %c8_i32 = arith.constant 8 : i32
    %33 = arith.muli %arg0, %c8_i32 : i32
    %34 = tpu.iota {dimensions = array<i32: 0>} : vector<8x1xi32>
    %35 = vector.broadcast %33 : i32 to vector<8x1xi32>
    %36 = arith.addi %35, %34 : vector<8x1xi32>
    %c16_i32 = arith.constant 16 : i32
    %37 = vector.broadcast %c16_i32 : i32 to vector<8x1xi32>
    %38 = arith.cmpi slt, %36, %37 : vector<8x1xi32>
    %c-100_i32 = arith.constant -100 : i32
    %39 = vector.broadcast %c-100_i32 : i32 to vector<8x1xi32>
    %40 = arith.cmpi ne, %9, %39 : vector<8x1xi32>
    %41 = arith.andi %38, %40 : vector<8x1xi1>
    %cst_10 = arith.constant 0.000000e+00 : f32
    %42 = vector.broadcast %cst_10 : f32 to vector<8x1xf32>
    %43 = arith.select %41, %32, %42 : vector<8x1xi1>, vector<8x1xf32>
    %cst_11 = arith.constant dense<0.000000e+00> : vector<1xf32>
    %44 = vector.multi_reduction <add>, %43, %cst_11 [0] : vector<8x1xf32> to vector<1xf32>
    %45 = vector.shape_cast %44 : vector<1xf32> to vector<1x1xf32>
    %46 = vector.shape_cast %45 : vector<1x1xf32> to vector<1x1x1xf32>
    %47 = vector.shape_cast %46 : vector<1x1x1xf32> to vector<1x1x1xf32>
    %48 = vector.broadcast %47 : vector<1x1x1xf32> to vector<1x8x128xf32>
    %c0_12 = arith.constant 0 : index
    %c0_13 = arith.constant 0 : index
    %c0_14 = arith.constant 0 : index
    %49 = vector.load %arg3[%c0_12, %c0_13, %c0_14] : memref<1x8x128xf32, #tpu.memory_space<vmem>>, vector<1x8x128xf32>
    tpu.vector_store %arg3[%c0_12, %c0_13, %c0_14], %48 {strides = array<i32>} : memref<1x8x128xf32, #tpu.memory_space<vmem>>, vector<1x8x128xf32>,
    return
  }
  func.func @transform_0(%arg0: i32) -> (i32, i32) {
    %c0_i32 = arith.constant 0 : i32
    %c0_i32_0 = arith.constant 0 : i32
    return %arg0, %c0_i32 : i32, i32
  }
  func.func @transform_1(%arg0: i32) -> (i32, i32) {
    %c0_i32 = arith.constant 0 : i32
    %c0_i32_0 = arith.constant 0 : i32
    return %arg0, %c0_i32 : i32, i32
  }
  func.func @transform_2(%arg0: i32) -> (i32, i32, i32) {
    %c0_i32 = arith.constant 0 : i32
    %c0_i32_0 = arith.constant 0 : i32
    %c0_i32_1 = arith.constant 0 : i32
    return %arg0, %c0_i32, %c0_i32_0 : i32, i32, i32
  }
}

</mosaic_0001>

<llo_original>
// kernel: tpu_custom_call.1
$region0: #{tpu_custom_call.1}
  #allocation0 [shape = 'u32[]', space=smem, size = 0x4, offset = 0x4, fixed_abs, tag = 'smem constant byte address 0x4 - core index']
  #allocation1 [shape = 'u32[144,128]{1,0:T(1,128)}', space=vmem, size = 0x12000, scoped, tag = 'internal scratch']
  %s0 = inlined_call_operand.vmem [shape: f32[16,128], index: 0, kind: input, shape index: {}]
  %s1 = inlined_call_operand.vmem [shape: s32[16,1], index: 1, kind: input, shape index: {}]
  %s2 = inlined_call_operand.hbm [shape: f32[2,8,128], index: 2, kind: output, shape index: {}]
  %s3 = sld [smem:[#allocation0]]
  $region41: #{tpu_custom_call.1} parent=0
    _
  %s5 = ssub.s32 1, %s3
  %s6 = scalar_select 0, %s5, %s3
  $region1: #{tpu_custom_call.1} parent=0
    #allocation2 [shape = 'u8[8192]{0}', space=vmem, size = 0x2000, scoped, tag = 'output window, operand 0']
    #allocation3 [shape = 's32[2]{0}', space=sflag, size = 0x8, scoped, tag = 'scoped memory for tpu_custom_call.1']
    %7 = vsyncpa [#allocation3], 0
    %s8 = scalar_lea.sflag [#allocation3], 1
    %9 = vsyncpa %s8, 0
    loop: start=0, step=1, limit=4
    $region2: #{tpu_custom_call.1} parent=1 // loop_pre_header
      _
    $region3: #{tpu_custom_call.1} parent=1 // loop_header
      %s11 = sphi 0, %s15
      %p12 = scmp.ge.s32.totalorder %s11, 4
      %s21 = sphi 0, %s23
      %s24 = sphi 0, %s21
      %s25 = sphi 0, %s24
      %s41 = sphi 0, %s25
      %s47 = sphi 0, %s49
      %s50 = sphi 0, %s47
      %s51 = sphi 0, %s50
      %s67 = sphi 0, %s51
      %s73 = sphi 0, %s75
      %s76 = sphi 0, %s73
      %s77 = sphi 0, %s76
      %s93 = sphi 0, %s77
    $region4: #{tpu_custom_call.1} parent=1 // loop_header_branch
      %14 = sbr.rel (%p12) target = $region8
    $region5: #{tpu_custom_call.1} parent=1 // loop_body
      %s16 = ssub.s32 %s11, 1
      %s17 = ssub.s32 %s11, 2
      %s18 = sadd.s32 %s11, 1
      %s19 = ssub.s32 %s11, %s18
      %p20 = scmp.eq.s32.totalorder %s19, 0
      %s22 = sadd.s32 %s21, 1
      %s23 = scalar_select %p20, %s21, %s22
      %p26 = pneg %p20
      %p27 = scmp.eq.s32.totalorder %s11, 1
      %p28 = por %p26, %p27
      %p29 = scmp.ne.s32.totalorder %s21, %s24
      %p30 = scmp.eq.s32.totalorder %s11, 0
      %p31 = por %p29, %p30
      %p32 = scmp.ne.s32.totalorder %s21, %s24
      %p33 = scmp.eq.s32.totalorder %s16, 1
      %p34 = por %p32, %p33
      %p35 = scmp.ne.s32.totalorder %s24, %s25
      %p36 = scmp.eq.s32.totalorder %s16, 0
      %p37 = por %p35, %p36
      %p38 = scmp.ne.s32.totalorder %s24, %s25
      %p39 = scmp.eq.s32.totalorder %s17, 1
      %p40 = por %p38, %p39
      %p42 = scmp.ne.s32.totalorder %s25, %s41
      %p43 = scmp.eq.s32.totalorder %s17, 0
      %p44 = por %p42, %p43
      %s45 = ssub.s32 %s11, %s18
      %p46 = scmp.eq.s32.totalorder %s45, 0
      %s48 = sadd.s32 %s47, 1
      %s49 = scalar_select %p46, %s47, %s48
      %p52 = pneg %p46
      %p53 = scmp.eq.s32.totalorder %s11, 1
      %p54 = por %p52, %p53
      %p55 = scmp.ne.s32.totalorder %s47, %s50
      %p56 = scmp.eq.s32.totalorder %s11, 0
      %p57 = por %p55, %p56
      %p58 = scmp.ne.s32.totalorder %s47, %s50
      %p59 = scmp.eq.s32.totalorder %s16, 1
      %p60 = por %p58, %p59
      %p61 = scmp.ne.s32.totalorder %s50, %s51
      %p62 = scmp.eq.s32.totalorder %s16, 0
      %p63 = por %p61, %p62
      %p64 = scmp.ne.s32.totalorder %s50, %s51
      %p65 = scmp.eq.s32.totalorder %s17, 1
      %p66 = por %p64, %p65
      %p68 = scmp.ne.s32.totalorder %s51, %s67
      %p69 = scmp.eq.s32.totalorder %s17, 0
      %p70 = por %p68, %p69
      %s71 = ssub.s32 %s11, %s18
      %p72 = scmp.eq.s32.totalorder %s71, 0
      %s74 = sadd.s32 %s73, 1
      %s75 = scalar_select %p72, %s73, %s74
      %p78 = pneg %p72
      %p79 = scmp.eq.s32.totalorder %s11, 1
      %p80 = por %p78, %p79
      %p81 = scmp.ne.s32.totalorder %s73, %s76
      %p82 = scmp.eq.s32.totalorder %s11, 0
      %p83 = por %p81, %p82
      %p84 = scmp.ne.s32.totalorder %s73, %s76
      %p85 = scmp.eq.s32.totalorder %s16, 1
      %p86 = por %p84, %p85
      %p87 = scmp.ne.s32.totalorder %s76, %s77
      %p88 = scmp.eq.s32.totalorder %s16, 0
      %p89 = por %p87, %p88
      %p90 = scmp.ne.s32.totalorder %s76, %s77
      %p91 = scmp.eq.s32.totalorder %s17, 1
      %p92 = por %p90, %p91
      %p94 = scmp.ne.s32.totalorder %s77, %s93
      %p95 = scmp.eq.s32.totalorder %s17, 0
      %p96 = por %p94, %p95
      %p97 = scmp.le.s32.totalorder 1, %s11
      %p98 = scmp.lt.s32.totalorder %s11, 3
      %p99 = pnand %p97, %p98
      %p100 = pneg %p99
      // Predicated region
      $region9: #{tpu_custom_call.1} parent=5 // pred_check
        _
      $region10: #{tpu_custom_call.1} parent=5 // pred_check_branch
        %102 = sbr.rel (%p99) target = $region12
      $region11: #{tpu_custom_call.1} parent=5 // pred_region
        %s103 = ssub.s32 %s11, 1
      $region12: #{tpu_custom_call.1} parent=5 // pred_fallthru
        _
      %p104 = scmp.lt.s32.totalorder %s11, 2
      // Predicated region
      $region13: #{tpu_custom_call.1} parent=5 // pred_check
        %p105 = pneg %p104
      $region14: #{tpu_custom_call.1} parent=5 // pred_check_branch
        %107 = sbr.rel (%p105) target = $region16
      $region15: #{tpu_custom_call.1} parent=5 // pred_region
        // Predicated region
        $region17: #{tpu_custom_call.1} parent=15 // pred_check
          %p108 = pneg %p31
        $region18: #{tpu_custom_call.1} parent=15 // pred_check_branch
          %110 = sbr.rel (%p108) target = $region20
        $region19: #{tpu_custom_call.1} parent=15 // pred_region
          %p111 = scmp.lt.s32.totalorder %s11, 1
          %s112 = scalar_select %p111, %s11, 1
          %s113 = smul.addr %s112, 8
          %s114 = scalar_lea.vmem %s0, %s113
        $region20: #{tpu_custom_call.1} parent=15 // pred_fallthru
          _
        // Predicated region
        $region21: #{tpu_custom_call.1} parent=15 // pred_check
          %p115 = pneg %p57
        $region22: #{tpu_custom_call.1} parent=15 // pred_check_branch
          %117 = sbr.rel (%p115) target = $region24
        $region23: #{tpu_custom_call.1} parent=15 // pred_region
          %p118 = scmp.lt.s32.totalorder %s11, 1
          %s119 = scalar_select %p118, %s11, 1
          %s120 = smul.addr %s119, 8
          %s121 = scalar_lea.vmem %s1, %s120
        $region24: #{tpu_custom_call.1} parent=15 // pred_fallthru
          _
      $region16: #{tpu_custom_call.1} parent=5 // pred_fallthru
        _
      %p122 = scmp.le.s32.totalorder 1, %s11
      %p123 = scmp.lt.s32.totalorder %s11, 3
      %p124 = pnand %p122, %p123
      %p125 = pneg %p124
      // Predicated region
      $region25: #{tpu_custom_call.1} parent=5 // pred_check
        _
      $region26: #{tpu_custom_call.1} parent=5 // pred_check_branch
        %127 = sbr.rel (%p124) target = $region28
      $region27: #{tpu_custom_call.1} parent=5 // pred_region
        %s128 = ssub.s32 %s11, 1
        %p129 = scmp.lt.s32.totalorder %s16, 1
        %s130 = scalar_select %p129, %s16, 1
        %s131 = smul.addr %s130, 8
        %s132 = scalar_lea.vmem %s0, %s131
        %p133 = pneg %p37
        %p134 = pneg %p34
        %p135 = scmp.lt.s32.totalorder %s16, 1
        %s136 = scalar_select %p135, %s16, 1
        %s137 = smul.addr %s136, 8
        %s138 = scalar_lea.vmem %s1, %s137
        %p139 = pneg %p63
        %p140 = pneg %p60
        %p141 = pneg %p89
        %p142 = pneg %p86
        %s143 = sand.u32 %s76, 1
        %s144 = scalar_lea.sflag [#allocation3], %s143
        %s145 = sand.u32 %s76, 1
        %s146 = smul.addr %s145, 8
        %s147 = scalar_lea.vmem [#allocation2], %s146
        %p148 = scmp.lt.s32.totalorder %s16, 1
        %s149 = scalar_select %p148, %s16, 1
        %s150 = smul.addr %s149, 8
        %s151 = scalar_lea.vmem %s0, %s150
        %p152 = scmp.lt.s32.totalorder %s16, 1
        %s153 = scalar_select %p152, %s16, 1
        %s154 = smul.addr %s153, 8
        %s155 = scalar_lea.vmem %s1, %s154
        %v156 = vld [vmem:[%s151] sm:$0xff]
        %157 = vmax.xlane.f32.xlu0 %v156
        %v158 = vpop.xlane.xlu0 %157
        %v159 = vsub.f32 %v156, %v158
        %v160 = vmul.f32 %v159, 1.442695
        %v161 = vpow.pop %v160
        %162 = vadd.xlane.f32.xlu0 %v161
        %v163 = vpop.xlane.xlu0 %162
        %v164 = vlog2.pop %v163
        %v165 = vmul.f32 %v164, 0.6931472
        %v166 = vld [vmem:[%s155] sm:$0xff]
        %v167 = vlaneseq
        %v168 = vand.u32 %v167, 127
        %169 = vset.pattern.permute.xlu0 0
        %170 = vperm.xlu0 %169, %v166
        %v171 = vpop.permute.xlu0 %170
        %vm172 = vcmp.eq.s32.totalorder %v168, %v171
        %v173 = vsel %vm172, 0.9, 0.0007874016
        %v174 = vmul.f32 %v173, %v156
        %175 = vadd.xlane.f32.xlu0 %v174
        %v176 = vpop.xlane.xlu0 %175
        %v177 = vsub.f32 %v176, %v158
        %v178 = vsub.f32 %v177, %v165
        %vm179 = vcmp.eq.s32.totalorder %v166, 28
        %v180 = vsel %vm179, 0.9, 0.0007874016
        %v181 = vsub.f32 %v159, %v165
        %183 = vrot.lane.b32.xlu0 %v181, 100
        %v184 = vpop.permute.xlu0 %183
        %v186 = vmul.f32 %v180, %v184
        %v187 = vsub.f32 %v178, %v186
        %v188 = vsub.f32 0.0, %v187
        %s189 = smul.u32 %s16, 8
        %v190 = vlaneseq
        %v191 = vshrl.u32 %v190, 7
        %v192 = vstv %s189
        %v193 = vadd.s32 %v192, %v191
        %vm194 = vcmp.lt.s32.totalorder %v193, 16
        %vm195 = vcmp.ne.s32.totalorder %v166, 4294967196
        %vm196 = vmand %vm194, %vm195
        %v197 = vsel %vm196, %v188, 0.0
        %vm198 = vcmask 7168
        %v199 = vsel %vm198, %v197, 0.0
        %v200 = vrot.slane %v199, 4
        %v201 = vadd.f32 %v199, %v200
        %v202 = vrot.slane %v201, 2
        %v203 = vadd.f32 %v201, %v202
        %v204 = vrot.slane %v203, 1
        %v205 = vadd.f32 %v203, %v204
        %207 = vset.pattern.permute.xlu0 0
        %208 = vperm.xlu0 %207, %v205
        %v209 = vpop.permute.xlu0 %208
        %211 = vst [vmem:[%s147] sm:$0xff] %v209
        %s212 = sand.u32 %s76, 1
        %s213 = scalar_lea.sflag [#allocation3], %s212
        %s214 = sand.u32 %s76, 1
        %s215 = smul.addr %s214, 8
        %s216 = scalar_lea.vmem [#allocation2], %s215
        // Predicated region
        $region29: #{tpu_custom_call.1} parent=27 // pred_check
          %p217 = pneg %p86
        $region30: #{tpu_custom_call.1} parent=27 // pred_check_branch
          %219 = sbr.rel (%p217) target = $region32
        $region31: #{tpu_custom_call.1} parent=27 // pred_region
          %s221 = ssub.s32 128, 128
          %222 = vsyncadd %s213, %s221
          %s223 = smul.addr %s16, 128
          %s224 = scalar_lea.hbm %s2, %s223
          %s226 = sshll.u32 %s216, 4
          %s227 = int_to_ptr.vmem [resolvable:$true] %s226
          %229 = dma.vmem_to_hbm [thread:$0]  %s227, 128, %s224, %s213
        $region32: #{tpu_custom_call.1} parent=27 // pred_fallthru
          _
      $region28: #{tpu_custom_call.1} parent=5 // pred_fallthru
        _
      %p230 = scmp.le.s32.totalorder 2, %s11
      // Predicated region
      $region33: #{tpu_custom_call.1} parent=5 // pred_check
        %p231 = pneg %p230
      $region34: #{tpu_custom_call.1} parent=5 // pred_check_branch
        %233 = sbr.rel (%p231) target = $region36
      $region35: #{tpu_custom_call.1} parent=5 // pred_region
        %s234 = ssub.s32 %s11, 2
        // Predicated region
        $region37: #{tpu_custom_call.1} parent=35 // pred_check
          %p235 = pneg %p92
        $region38: #{tpu_custom_call.1} parent=35 // pred_check_branch
          %237 = sbr.rel (%p235) target = $region40
        $region39: #{tpu_custom_call.1} parent=35 // pred_region
          %s238 = sand.u32 %s77, 1
          %s239 = scalar_lea.sflag [#allocation3], %s238
          %s240 = sand.u32 %s77, 1
          %s241 = smul.addr %s240, 8
          %s242 = scalar_lea.vmem [#allocation2], %s241
          %243 = dma.done %s239, 128
        $region40: #{tpu_custom_call.1} parent=35 // pred_fallthru
          _
      $region36: #{tpu_custom_call.1} parent=5 // pred_fallthru
        _
    $region6: #{tpu_custom_call.1} parent=1 // loop_footer
      %s15 = sadd.s32 1, %s11
    $region7: #{tpu_custom_call.1} parent=1 // loop_footer_branch
      %10 = sbr.rel target = $region3
    $region8: #{tpu_custom_call.1} parent=1 // loop_exit
      _
    %244 = vsyncpa [#allocation3], 1
    %s245 = scalar_lea.sflag [#allocation3], 1
    %246 = vsyncpa %s245, 1

</llo_original>
